<compile_context>
chip_gen: v5e
topology: v5e:2x2
jax: 0.10.0
libtpu: 0.0.40
codegen_flags: <defaults>
</compile_context>

<pallas_src>
import jax
import jax.numpy as jnp
from jax.experimental import pallas as pl
from jax.experimental.pallas import tpu as pltpu

LEAKY_SLOPE = 0.01   # F.leaky_relu default negative_slope
LN_EPS = 1e-5        # nn.LayerNorm default eps
LANE = 128


def _round_up(n, m):
    return ((n + m - 1) // m) * m


# ---------------------------------------------------------------------------
# Parameter packing: all layer params -> one (rows, 128) f32 array.
#   - weight W_i stored as (fout, fin) segment (kernel does W @ h)
#   - bias / gamma / beta stored as (fout, 1) column segments (broadcast over lanes)
# Every segment starts on an 8-row boundary; minor dim padded to 128 lanes.
# ---------------------------------------------------------------------------
def pack_params(params, feats):
    n_layers = len(feats) - 1
    it = iter(params)
    blocks, layout = [], []
    row = 0

    def add(mat):
        nonlocal row
        mat = jnp.asarray(mat, jnp.float32)
        if mat.ndim == 1:
            mat = mat.reshape(-1, 1)
        r = _round_up(mat.shape[0], 8)
        blocks.append(jnp.pad(mat, ((0, r - mat.shape[0]), (0, LANE - mat.shape[1]))))
        off = row
        row += r
        return off

    for i in range(n_layers):
        W, b = next(it), next(it)                 # W: (fout, fin), b: (fout,)
        entry = {"w": add(W), "b": add(b)}
        if i < n_layers - 1:                      # hidden layers carry LayerNorm affine params
            entry["g"] = add(next(it))
            entry["be"] = add(next(it))
        layout.append(entry)
    return jnp.concatenate(blocks, axis=0), layout


# ---------------------------------------------------------------------------
# Kernel (unrolled over layers at trace time; static slices into the packed params).
# Works entirely in the flipped layout: h is (features, tb).
# ---------------------------------------------------------------------------
def _build_kernel(feats, layout):
    n_layers = len(feats) - 1

    def kernel(x_ref, p_ref, o_ref):
        h = x_ref[...]                                          # (feats[0], tb) f32
        for i in range(n_layers):                               # Python loop -> unrolled
            fin, fout = feats[i], feats[i + 1]
            seg = layout[i]
            w = p_ref[seg["w"]:seg["w"] + fout, :fin]           # (fout, fin) f32, VMEM-resident
            b = p_ref[seg["b"]:seg["b"] + fout, 0:1]            # (fout, 1)
            # bf16 operands into the MXU, f32 accumulation; everything else stays f32.
            h = jnp.dot(w.astype(jnp.bfloat16), h.astype(jnp.bfloat16),
                        preferred_element_type=jnp.float32) + b
            if i < n_layers - 1:
                g = p_ref[seg["g"]:seg["g"] + fout, 0:1]
                be = p_ref[seg["be"]:seg["be"] + fout, 0:1]
                # LayerNorm over features (axis 0 = sublanes), centered variance.
                mu = jnp.mean(h, axis=0, keepdims=True)         # (1, tb)
                var = jnp.mean((h - mu) ** 2, axis=0, keepdims=True)
                h = (h - mu) * jax.lax.rsqrt(var + LN_EPS) * g + be
                # LeakyReLU; dropout p=0.0 is identity.
                h = jnp.maximum(h, LEAKY_SLOPE * h)
        o_ref[...] = h.astype(o_ref.dtype)

    return kernel


# ---------------------------------------------------------------------------
# Wrapper
# ---------------------------------------------------------------------------
def _choose_tile(B, batch_tile):
    """Batch tile on the lane axis: multiple of 128, >=2 grid steps when B allows."""
    batch_tile = min(batch_tile, 32768)          # stay well inside v7x's 64 MiB VMEM
    if B < LANE:
        return B                                 # single block equal to full (tiny) batch
    tb = _round_up(min(batch_tile, B), LANE)
    if pl.cdiv(B, tb) < 2:                       # keep both v7x TCs busy via the parallel axis
        tb = max(LANE, _round_up(pl.cdiv(B, 2), LANE))
    return tb


def mlp_forward(x, params, feats, *, batch_tile=8192):
    """Fused MLP forward. x: (B, feats[0]) f32; params: flat tuple of (W, b[, gamma, beta])."""
    B, in_size = x.shape
    assert in_size == feats[0]
    out_size = feats[-1]

    packed, layout = pack_params(params, feats)
    rows, width = packed.shape

    tb = _choose_tile(B, batch_tile)
    grid = (pl.cdiv(B, tb),)

    xt = jnp.transpose(x)                        # (in_size, B): batch on the lane axis
    kernel = _build_kernel(feats, layout)

    out_t = pl.pallas_call(
        kernel,
        out_shape=jax.ShapeDtypeStruct((out_size, B), x.dtype),
        grid_spec=pltpu.PrefetchScalarGridSpec(
            num_scalar_prefetch=0,
            grid=grid,
            in_specs=[
                pl.BlockSpec((in_size, tb), lambda i: (0, i)),
                # Single packed param array, constant block index -> stays VMEM-resident.
                pl.BlockSpec((rows, width), lambda i: (0, 0)),
            ],
            out_specs=pl.BlockSpec((out_size, tb), lambda i: (0, i)),
        ),
        compiler_params=pltpu.CompilerParams(
            dimension_semantics=("parallel",)),
    )(xt, packed)
    return jnp.transpose(out_t)                  # back to (B, out_size)


# ---------------------------------------------------------------------------
# Deterministic init (PyTorch-style storage) + pure-JAX reference
# ---------------------------------------------------------------------------
def init_params(key, in_size, hidden_sizes, out_size, dtype=jnp.float32):
    """nn.Linear-style uniform fan-in init; W stored as (out, in), b as (out,)."""
    feats = [in_size, *hidden_sizes, out_size]
    params = []
    for i in range(len(feats) - 1):
        fan_in, fan_out = feats[i], feats[i + 1]
        key, kw, kb = jax.random.split(key, 3)
        bound = 1.0 / jnp.sqrt(fan_in)
        W = jax.random.uniform(kw, (fan_out, fan_in), dtype, -bound, bound)
        b = jax.random.uniform(kb, (fan_out,), dtype, -bound, bound)
        if i < len(feats) - 2:  # hidden layers also get LayerNorm affine params
            params += [W, b, jnp.ones((fan_out,), dtype), jnp.zeros((fan_out,), dtype)]
        else:
            params += [W, b]
    return tuple(params)


def mlp_reference(x, params, feats, *, matmul_dtype=jnp.float32):
    """Pure-JAX reference in the PyTorch (B, feat) layout.

    matmul_dtype=jnp.bfloat16 replicates the kernel's MXU operand quantization
    (f32 accumulation), isolating kernel structure from the bf16 rounding choice.
    """
    n_layers = len(feats) - 1
    it = iter(params)
    h = x.astype(jnp.float32)
    for i in range(n_layers):
        W, b = next(it), next(it)
        h = jnp.dot(h.astype(matmul_dtype), jnp.transpose(W).astype(matmul_dtype),
                    preferred_element_type=jnp.float32) + b[None, :]
        if i < n_layers - 1:
            g, be = next(it), next(it)
            mu = jnp.mean(h, axis=-1, keepdims=True)
            var = jnp.mean((h - mu) ** 2, axis=-1, keepdims=True)
            h = (h - mu) * jax.lax.rsqrt(var + LN_EPS) * g[None, :] + be[None, :]
            h = jnp.where(h >= 0, h, LEAKY_SLOPE * h)
    return h


if __name__ == "__main__":
    in_size, hidden, out_size = 16, [32, 32], 8
    feats = [in_size, *hidden, out_size]
    batch = 512          # small demo batch; tile auto-selects 256 -> grid=(2,), both TCs fed

    key = jax.random.PRNGKey(0)
    kx, kp = jax.random.split(key)
    x = jax.random.normal(kx, (batch, in_size), jnp.float32)
    params = init_params(kp, in_size, hidden, out_size)

    y = mlp_forward(x, params, feats)
    y = jax.block_until_ready(y)

    # Reference applies the same bf16 MXU-operand quantization the kernel uses, so the
    # comparison isolates kernel structure (layout flip, packed params, LN/activation math).
    y_ref = mlp_reference(x, params, feats, matmul_dtype=jnp.bfloat16)

    assert y.shape == (batch, out_size)
    assert jnp.allclose(y, y_ref, atol=1e-3, rtol=1e-3), "mismatch vs reference"
    print("KERNEL_OK")
</pallas_src>

<mosaic_0001>
module attributes {stable_mosaic.version = 11 : i64} {
  func.func @kernel(%arg0: i32, %arg1: memref<16x256xf32, #tpu.memory_space<vmem>>, %arg2: memref<272x128xf32, #tpu.memory_space<vmem>>, %arg3: memref<8x256xf32, #tpu.memory_space<vmem>>) attributes {dimension_semantics = [#tpu.dimension_semantics<parallel>], iteration_bounds = array<i64: 2>, scalar_prefetch = 0 : i64, scratch_operands = 0 : i64, tpu.core_type = #tpu.core_type<tc>, window_params = [{transform_indices = @transform_0, window_bounds = array<i64: 16, 256>}, {pipeline_mode = #tpu.pipeline_mode<synchronous>, transform_indices = @transform_1, window_bounds = array<i64: 272, 128>}, {transform_indices = @transform_2, window_bounds = array<i64: 8, 256>}]} {
    %c0 = arith.constant 0 : index
    %c0_0 = arith.constant 0 : index
    %0 = vector.load %arg1[%c0, %c0_0] : memref<16x256xf32, #tpu.memory_space<vmem>>, vector<16x256xf32>
    %c0_1 = arith.constant 0 : index
    %c0_2 = arith.constant 0 : index
    %1 = vector.load %arg2[%c0_1, %c0_2] : memref<272x128xf32, #tpu.memory_space<vmem>>, vector<32x16xf32>
    %c32 = arith.constant 32 : index
    %c0_3 = arith.constant 0 : index
    %2 = vector.load %arg2[%c32, %c0_3] : memref<272x128xf32, #tpu.memory_space<vmem>>, vector<32x1xf32>
    %3 = arith.truncf %1 : vector<32x16xf32> to vector<32x16xbf16>
    %4 = arith.truncf %0 : vector<16x256xf32> to vector<16x256xbf16>
    %cst = arith.constant dense<0.000000e+00> : vector<32x256xf32>
    %5 = tpu.matmul %3, %4, %cst {dimension_numbers = #tpu.dot_dimension_numbers<[1], [0], [0], [1], [0, 0, 1, 1], [], []>} : vector<32x16xbf16>, vector<16x256xbf16>, vector<32x256xf32> -> vector<32x256xf32>
    %6 = vector.broadcast %2 : vector<32x1xf32> to vector<32x256xf32>
    %7 = arith.addf %5, %6 : vector<32x256xf32>
    %c64 = arith.constant 64 : index
    %c0_4 = arith.constant 0 : index
    %8 = vector.load %arg2[%c64, %c0_4] : memref<272x128xf32, #tpu.memory_space<vmem>>, vector<32x1xf32>
    %c96 = arith.constant 96 : index
    %c0_5 = arith.constant 0 : index
    %9 = vector.load %arg2[%c96, %c0_5] : memref<272x128xf32, #tpu.memory_space<vmem>>, vector<32x1xf32>
    %cst_6 = arith.constant dense<0.000000e+00> : vector<256xf32>
    %10 = vector.multi_reduction <add>, %7, %cst_6 [0] : vector<32x256xf32> to vector<256xf32>
    %11 = vector.shape_cast %10 : vector<256xf32> to vector<1x256xf32>
    %cst_7 = arith.constant 3.200000e+01 : f32
    %12 = vector.broadcast %cst_7 : f32 to vector<1x256xf32>
    %13 = arith.divf %11, %12 : vector<1x256xf32>
    %14 = vector.broadcast %13 : vector<1x256xf32> to vector<32x256xf32>
    %15 = arith.subf %7, %14 : vector<32x256xf32>
    %16 = arith.mulf %15, %15 : vector<32x256xf32>
    %cst_8 = arith.constant dense<0.000000e+00> : vector<256xf32>
    %17 = vector.multi_reduction <add>, %16, %cst_8 [0] : vector<32x256xf32> to vector<256xf32>
    %18 = vector.shape_cast %17 : vector<256xf32> to vector<1x256xf32>
    %cst_9 = arith.constant 3.200000e+01 : f32
    %19 = vector.broadcast %cst_9 : f32 to vector<1x256xf32>
    %20 = arith.divf %18, %19 : vector<1x256xf32>
    %21 = vector.broadcast %13 : vector<1x256xf32> to vector<32x256xf32>
    %22 = arith.subf %7, %21 : vector<32x256xf32>
    %cst_10 = arith.constant 9.99999974E-6 : f32
    %23 = vector.broadcast %cst_10 : f32 to vector<1x256xf32>
    %24 = arith.addf %20, %23 : vector<1x256xf32>
    %25 = math.rsqrt %24 : vector<1x256xf32>
    %26 = vector.broadcast %25 : vector<1x256xf32> to vector<32x256xf32>
    %27 = arith.mulf %22, %26 : vector<32x256xf32>
    %28 = vector.broadcast %8 : vector<32x1xf32> to vector<32x256xf32>
    %29 = arith.mulf %27, %28 : vector<32x256xf32>
    %30 = vector.broadcast %9 : vector<32x1xf32> to vector<32x256xf32>
    %31 = arith.addf %29, %30 : vector<32x256xf32>
    %cst_11 = arith.constant 0.00999999977 : f32
    %32 = vector.broadcast %cst_11 : f32 to vector<32x256xf32>
    %33 = arith.mulf %32, %31 : vector<32x256xf32>
    %34 = arith.maximumf %31, %33 : vector<32x256xf32>
    %c128 = arith.constant 128 : index
    %c0_12 = arith.constant 0 : index
    %35 = vector.load %arg2[%c128, %c0_12] : memref<272x128xf32, #tpu.memory_space<vmem>>, vector<32x32xf32>
    %c160 = arith.constant 160 : index
    %c0_13 = arith.constant 0 : index
    %36 = vector.load %arg2[%c160, %c0_13] : memref<272x128xf32, #tpu.memory_space<vmem>>, vector<32x1xf32>
    %37 = arith.truncf %35 : vector<32x32xf32> to vector<32x32xbf16>
    %38 = arith.truncf %34 : vector<32x256xf32> to vector<32x256xbf16>
    %cst_14 = arith.constant dense<0.000000e+00> : vector<32x256xf32>
    %39 = tpu.matmul %37, %38, %cst_14 {dimension_numbers = #tpu.dot_dimension_numbers<[1], [0], [0], [1], [0, 0, 1, 1], [], []>} : vector<32x32xbf16>, vector<32x256xbf16>, vector<32x256xf32> -> vector<32x256xf32>
    %40 = vector.broadcast %36 : vector<32x1xf32> to vector<32x256xf32>
    %41 = arith.addf %39, %40 : vector<32x256xf32>
    %c192 = arith.constant 192 : index
    %c0_15 = arith.constant 0 : index
    %42 = vector.load %arg2[%c192, %c0_15] : memref<272x128xf32, #tpu.memory_space<vmem>>, vector<32x1xf32>
    %c224 = arith.constant 224 : index
    %c0_16 = arith.constant 0 : index
    %43 = vector.load %arg2[%c224, %c0_16] : memref<272x128xf32, #tpu.memory_space<vmem>>, vector<32x1xf32>
    %cst_17 = arith.constant dense<0.000000e+00> : vector<256xf32>
    %44 = vector.multi_reduction <add>, %41, %cst_17 [0] : vector<32x256xf32> to vector<256xf32>
    %45 = vector.shape_cast %44 : vector<256xf32> to vector<1x256xf32>
    %cst_18 = arith.constant 3.200000e+01 : f32
    %46 = vector.broadcast %cst_18 : f32 to vector<1x256xf32>
    %47 = arith.divf %45, %46 : vector<1x256xf32>
    %48 = vector.broadcast %47 : vector<1x256xf32> to vector<32x256xf32>
    %49 = arith.subf %41, %48 : vector<32x256xf32>
    %50 = arith.mulf %49, %49 : vector<32x256xf32>
    %cst_19 = arith.constant dense<0.000000e+00> : vector<256xf32>
    %51 = vector.multi_reduction <add>, %50, %cst_19 [0] : vector<32x256xf32> to vector<256xf32>
    %52 = vector.shape_cast %51 : vector<256xf32> to vector<1x256xf32>
    %cst_20 = arith.constant 3.200000e+01 : f32
    %53 = vector.broadcast %cst_20 : f32 to vector<1x256xf32>
    %54 = arith.divf %52, %53 : vector<1x256xf32>
    %55 = vector.broadcast %47 : vector<1x256xf32> to vector<32x256xf32>
    %56 = arith.subf %41, %55 : vector<32x256xf32>
    %cst_21 = arith.constant 9.99999974E-6 : f32
    %57 = vector.broadcast %cst_21 : f32 to vector<1x256xf32>
    %58 = arith.addf %54, %57 : vector<1x256xf32>
    %59 = math.rsqrt %58 : vector<1x256xf32>
    %60 = vector.broadcast %59 : vector<1x256xf32> to vector<32x256xf32>
    %61 = arith.mulf %56, %60 : vector<32x256xf32>
    %62 = vector.broadcast %42 : vector<32x1xf32> to vector<32x256xf32>
    %63 = arith.mulf %61, %62 : vector<32x256xf32>
    %64 = vector.broadcast %43 : vector<32x1xf32> to vector<32x256xf32>
    %65 = arith.addf %63, %64 : vector<32x256xf32>
    %cst_22 = arith.constant 0.00999999977 : f32
    %66 = vector.broadcast %cst_22 : f32 to vector<32x256xf32>
    %67 = arith.mulf %66, %65 : vector<32x256xf32>
    %68 = arith.maximumf %65, %67 : vector<32x256xf32>
    %c256 = arith.constant 256 : index
    %c0_23 = arith.constant 0 : index
    %69 = vector.load %arg2[%c256, %c0_23] : memref<272x128xf32, #tpu.memory_space<vmem>>, vector<8x32xf32>
    %c264 = arith.constant 264 : index
    %c0_24 = arith.constant 0 : index
    %70 = vector.load %arg2[%c264, %c0_24] : memref<272x128xf32, #tpu.memory_space<vmem>>, vector<8x1xf32>
    %71 = arith.truncf %69 : vector<8x32xf32> to vector<8x32xbf16>
    %72 = arith.truncf %68 : vector<32x256xf32> to vector<32x256xbf16>
    %cst_25 = arith.constant dense<0.000000e+00> : vector<8x256xf32>
    %73 = tpu.matmul %71, %72, %cst_25 {dimension_numbers = #tpu.dot_dimension_numbers<[1], [0], [0], [1], [0, 0, 1, 1], [], []>} : vector<8x32xbf16>, vector<32x256xbf16>, vector<8x256xf32> -> vector<8x256xf32>
    %74 = vector.broadcast %70 : vector<8x1xf32> to vector<8x256xf32>
    %75 = arith.addf %73, %74 : vector<8x256xf32>
    %c0_26 = arith.constant 0 : index
    %c0_27 = arith.constant 0 : index
    %76 = vector.load %arg3[%c0_26, %c0_27] : memref<8x256xf32, #tpu.memory_space<vmem>>, vector<8x256xf32>
    tpu.vector_store %arg3[%c0_26, %c0_27], %75 {strides = array<i32>} : memref<8x256xf32, #tpu.memory_space<vmem>>, vector<8x256xf32>,
    return
  }
  func.func @transform_0(%arg0: i32) -> (i32, i32) {
    %c0_i32 = arith.constant 0 : i32
    %c0_i32_0 = arith.constant 0 : i32
    return %c0_i32, %arg0 : i32, i32
  }
  func.func @transform_1(%arg0: i32) -> (i32, i32) {
    %c0_i32 = arith.constant 0 : i32
    %c0_i32_0 = arith.constant 0 : i32
    %c0_i32_1 = arith.constant 0 : i32
    return %c0_i32, %c0_i32_0 : i32, i32
  }
  func.func @transform_2(%arg0: i32) -> (i32, i32) {
    %c0_i32 = arith.constant 0 : i32
    %c0_i32_0 = arith.constant 0 : i32
    return %c0_i32, %arg0 : i32, i32
  }
}

</mosaic_0001>

<llo_original>
// kernel: tpu_custom_call.1
$region0: #{tpu_custom_call.1}
  #allocation0 [shape = 'u32[]', space=smem, size = 0x4, offset = 0x4, fixed_abs, tag = 'smem constant byte address 0x4 - core index']
  #allocation1 [shape = 'u32[72,128]{1,0:T(1,128)}', space=vmem, size = 0x9000, scoped, tag = 'internal scratch']
  %s0 = inlined_call_operand.hbm [shape: f32[16,512], index: 0, kind: input, shape index: {}]
  %s1 = inlined_call_operand.hbm [shape: f32[272,128], index: 1, kind: input, shape index: {}]
  %s2 = inlined_call_operand.hbm [shape: f32[8,512], index: 2, kind: output, shape index: {}]
  %s3 = sld [smem:[#allocation0]]
  $region49: #{tpu_custom_call.1} parent=0
    _
  %s5 = ssub.s32 1, %s3
  %s6 = scalar_select 0, %s5, %s3
  $region1: #{tpu_custom_call.1} parent=0
    #allocation2 [shape = 'u8[32768]{0}', space=vmem, size = 0x8000, scoped, tag = 'input window, operand 0']
    #allocation3 [shape = 's32[2]{0}', space=sflag, size = 0x8, scoped, tag = 'scoped memory for tpu_custom_call.1']
    #allocation4 [shape = 's32[2]{0}', space=sflag, size = 0x8, scoped, tag = 'scoped memory for tpu_custom_call.1']
    #allocation5 [shape = 'u8[139264]{0}', space=vmem, size = 0x22000, scoped, tag = 'input window, operand 1, single buffered']
    #allocation6 [shape = 's32[1]{0}', space=sflag, size = 0x4, scoped, tag = 'scoped memory for tpu_custom_call.1']
    #allocation7 [shape = 'u8[16384]{0}', space=vmem, size = 0x4000, scoped, tag = 'output window, operand 0']
    %7 = vsyncpa [#allocation3], 0
    %s8 = scalar_lea.sflag [#allocation3], 1
    %9 = vsyncpa %s8, 0
    %10 = vsyncpa [#allocation6], 0
    %11 = vsyncpa [#allocation4], 0
    %s12 = scalar_lea.sflag [#allocation4], 1
    %13 = vsyncpa %s12, 0
    loop: start=0, step=1, limit=4
    $region2: #{tpu_custom_call.1} parent=1 // loop_pre_header
      _
    $region3: #{tpu_custom_call.1} parent=1 // loop_header
      %s15 = sphi 0, %s19
      %p16 = scmp.ge.s32.totalorder %s15, 4
      %s25 = sphi 0, %s27
      %s28 = sphi 0, %s25
      %s29 = sphi 0, %s28
      %s45 = sphi 0, %s29
      %s49 = sphi 0, %s49
      %s51 = sphi 0, %s49
      %s52 = sphi 0, %s51
      %s66 = sphi 0, %s52
      %s72 = sphi 0, %s74
      %s75 = sphi 0, %s72
      %s76 = sphi 0, %s75
      %s92 = sphi 0, %s76
    $region4: #{tpu_custom_call.1} parent=1 // loop_header_branch
      %18 = sbr.rel (%p16) target = $region8
    $region5: #{tpu_custom_call.1} parent=1 // loop_body
      %s20 = ssub.s32 %s15, 1
      %s21 = ssub.s32 %s15, 2
      %s22 = sadd.s32 %s15, 1
      %s23 = ssub.s32 %s15, %s22
      %p24 = scmp.eq.s32.totalorder %s23, 0
      %s26 = sadd.s32 %s25, 1
      %s27 = scalar_select %p24, %s25, %s26
      %p30 = pneg %p24
      %p31 = scmp.eq.s32.totalorder %s15, 1
      %p32 = por %p30, %p31
      %p33 = scmp.ne.s32.totalorder %s25, %s28
      %p34 = scmp.eq.s32.totalorder %s15, 0
      %p35 = por %p33, %p34
      %p36 = scmp.ne.s32.totalorder %s25, %s28
      %p37 = scmp.eq.s32.totalorder %s20, 1
      %p38 = por %p36, %p37
      %p39 = scmp.ne.s32.totalorder %s28, %s29
      %p40 = scmp.eq.s32.totalorder %s20, 0
      %p41 = por %p39, %p40
      %p42 = scmp.ne.s32.totalorder %s28, %s29
      %p43 = scmp.eq.s32.totalorder %s21, 1
      %p44 = por %p42, %p43
      %p46 = scmp.ne.s32.totalorder %s29, %s45
      %p47 = scmp.eq.s32.totalorder %s21, 0
      %p48 = por %p46, %p47
      %s50 = sadd.s32 %s49, 1
      %p53 = scmp.eq.s32.totalorder %s15, 1
      %p54 = scmp.ne.s32.totalorder %s49, %s51
      %p55 = scmp.eq.s32.totalorder %s15, 0
      %p56 = por %p54, %p55
      %p57 = scmp.ne.s32.totalorder %s49, %s51
      %p58 = scmp.eq.s32.totalorder %s20, 1
      %p59 = por %p57, %p58
      %p60 = scmp.ne.s32.totalorder %s51, %s52
      %p61 = scmp.eq.s32.totalorder %s20, 0
      %p62 = por %p60, %p61
      %p63 = scmp.ne.s32.totalorder %s51, %s52
      %p64 = scmp.eq.s32.totalorder %s21, 1
      %p65 = por %p63, %p64
      %p67 = scmp.ne.s32.totalorder %s52, %s66
      %p68 = scmp.eq.s32.totalorder %s21, 0
      %p69 = por %p67, %p68
      %s70 = ssub.s32 %s15, %s22
      %p71 = scmp.eq.s32.totalorder %s70, 0
      %s73 = sadd.s32 %s72, 1
      %s74 = scalar_select %p71, %s72, %s73
      %p77 = pneg %p71
      %p78 = scmp.eq.s32.totalorder %s15, 1
      %p79 = por %p77, %p78
      %p80 = scmp.ne.s32.totalorder %s72, %s75
      %p81 = scmp.eq.s32.totalorder %s15, 0
      %p82 = por %p80, %p81
      %p83 = scmp.ne.s32.totalorder %s72, %s75
      %p84 = scmp.eq.s32.totalorder %s20, 1
      %p85 = por %p83, %p84
      %p86 = scmp.ne.s32.totalorder %s75, %s76
      %p87 = scmp.eq.s32.totalorder %s20, 0
      %p88 = por %p86, %p87
      %p89 = scmp.ne.s32.totalorder %s75, %s76
      %p90 = scmp.eq.s32.totalorder %s21, 1
      %p91 = por %p89, %p90
      %p93 = scmp.ne.s32.totalorder %s76, %s92
      %p94 = scmp.eq.s32.totalorder %s21, 0
      %p95 = por %p93, %p94
      %p96 = scmp.le.s32.totalorder 1, %s15
      %p97 = scmp.lt.s32.totalorder %s15, 3
      %p98 = pnand %p96, %p97
      %p99 = pneg %p98
      // Predicated region
      $region9: #{tpu_custom_call.1} parent=5 // pred_check
        _
      $region10: #{tpu_custom_call.1} parent=5 // pred_check_branch
        %101 = sbr.rel (%p98) target = $region12
      $region11: #{tpu_custom_call.1} parent=5 // pred_region
        %s102 = ssub.s32 %s15, 1
        // Predicated region
        $region13: #{tpu_custom_call.1} parent=11 // pred_check
          %p103 = pneg %p62
        $region14: #{tpu_custom_call.1} parent=11 // pred_check_branch
          %105 = sbr.rel (%p103) target = $region16
        $region15: #{tpu_custom_call.1} parent=11 // pred_region
          %107 = vsyncadd [#allocation6], 0
          %s108 = sshll.u32 %s1, 4
          %s109 = int_to_ptr.hbm [resolvable:$true] %s108
          %s110 = sshll.u32 [#allocation5], 4
          %s111 = int_to_ptr.vmem [resolvable:$true] %s110
          %116 = dma.hbm_to_vmem [thread:$0]  %s109, 4352, %s111, [#allocation6], 128, 128, 8
        $region16: #{tpu_custom_call.1} parent=11 // pred_fallthru
          _
      $region12: #{tpu_custom_call.1} parent=5 // pred_fallthru
        _
      %p117 = scmp.lt.s32.totalorder %s15, 2
      // Predicated region
      $region17: #{tpu_custom_call.1} parent=5 // pred_check
        %p118 = pneg %p117
      $region18: #{tpu_custom_call.1} parent=5 // pred_check_branch
        %120 = sbr.rel (%p118) target = $region20
      $region19: #{tpu_custom_call.1} parent=5 // pred_region
        // Predicated region
        $region21: #{tpu_custom_call.1} parent=19 // pred_check
          %p121 = pneg %p35
        $region22: #{tpu_custom_call.1} parent=19 // pred_check_branch
          %123 = sbr.rel (%p121) target = $region24
        $region23: #{tpu_custom_call.1} parent=19 // pred_region
          %s124 = sand.u32 %s25, 1
          %s125 = scalar_lea.sflag [#allocation3], %s124
          %s126 = sand.u32 %s25, 1
          %s127 = smul.addr %s126, 32
          %s128 = scalar_lea.vmem [#allocation2], %s127
          %s129 = smul.u32 2, %s15
          %131 = vsyncadd %s125, 0
          %s132 = smul.addr %s129, 8
          %s133 = scalar_lea.hbm %s0, %s132
          %s134 = sshll.u32 %s133, 4
          %s135 = int_to_ptr.hbm [resolvable:$true] %s134
          %s136 = sshll.u32 %s128, 4
          %s137 = int_to_ptr.vmem [resolvable:$true] %s136
          %142 = dma.hbm_to_vmem [thread:$0]  %s135, 512, %s137, %s125, 512, 256, 16
        $region24: #{tpu_custom_call.1} parent=19 // pred_fallthru
          _
      $region20: #{tpu_custom_call.1} parent=5 // pred_fallthru
        _
      %p143 = scmp.le.s32.totalorder 1, %s15
      %p144 = scmp.lt.s32.totalorder %s15, 3
      %p145 = pnand %p143, %p144
      %p146 = pneg %p145
      // Predicated region
      $region25: #{tpu_custom_call.1} parent=5 // pred_check
        _
      $region26: #{tpu_custom_call.1} parent=5 // pred_check_branch
        %148 = sbr.rel (%p145) target = $region28
      $region27: #{tpu_custom_call.1} parent=5 // pred_region
        %s149 = ssub.s32 %s15, 1
        %s150 = sand.u32 %s28, 1
        %s151 = scalar_lea.sflag [#allocation3], %s150
        %s152 = sand.u32 %s28, 1
        %s153 = smul.addr %s152, 32
        %s154 = scalar_lea.vmem [#allocation2], %s153
        // Predicated region
        $region29: #{tpu_custom_call.1} parent=27 // pred_check
          %p155 = pneg %p41
        $region30: #{tpu_custom_call.1} parent=27 // pred_check_branch
          %157 = sbr.rel (%p155) target = $region32
        $region31: #{tpu_custom_call.1} parent=27 // pred_region
          %159 = dma.done %s151, 512
        $region32: #{tpu_custom_call.1} parent=27 // pred_fallthru
          _
        // Predicated region
        $region33: #{tpu_custom_call.1} parent=27 // pred_check
          %p160 = pneg %p62
        $region34: #{tpu_custom_call.1} parent=27 // pred_check_branch
          %162 = sbr.rel (%p160) target = $region36
        $region35: #{tpu_custom_call.1} parent=27 // pred_region
          %164 = dma.done [#allocation6], 4352
        $region36: #{tpu_custom_call.1} parent=27 // pred_fallthru
          _
        %s165 = sand.u32 %s28, 1
        %s166 = scalar_lea.sflag [#allocation3], %s165
        %s167 = sand.u32 %s28, 1
        %s168 = smul.addr %s167, 32
        %s169 = scalar_lea.vmem [#allocation2], %s168
        %p170 = pneg %p41
        %p171 = pneg %p38
        %p172 = pneg %p62
        %p173 = pneg %p59
        %p174 = pneg %p88
        %p175 = pneg %p85
        %s176 = sand.u32 %s75, 1
        %s177 = scalar_lea.sflag [#allocation4], %s176
        %s178 = sand.u32 %s75, 1
        %s179 = smul.addr %s178, 16
        %s180 = scalar_lea.vmem [#allocation7], %s179
        %s181 = smul.u32 2, %s20
        %s182 = smul.u32 2, %s20
        %v184 = vld [vmem:[%s154] sm:$0xff]
        %v185 = vld [vmem:[%s154 + $0x8] sm:$0xff]
        %v186 = vld [vmem:[%s154 + $0x10] sm:$0xff]
        %v187 = vld [vmem:[%s154 + $0x18] sm:$0xff]
        %v188 = vld [vmem:[#allocation5] sm:$0xff]
        %v189 = vld [vmem:[#allocation5 + $0x8] sm:$0xff]
        %v190 = vld [vmem:[#allocation5 + $0x10] sm:$0xff]
        %v191 = vld [vmem:[#allocation5 + $0x18] sm:$0xff]
        %v192 = vld [vmem:[#allocation5 + $0x20] sm:$0xff]
        %v193 = vld [vmem:[#allocation5 + $0x28] sm:$0xff]
        %v194 = vld [vmem:[#allocation5 + $0x30] sm:$0xff]
        %v195 = vld [vmem:[#allocation5 + $0x38] sm:$0xff]
        %v196 = vpack.c.bf16 %v189, %v188
        %v197 = vpack.c.bf16 %v191, %v190
        %v198 = vpack.c.bf16 %v186, %v184
        %v199 = vpack.c.bf16 %v187, %v185
        %201 = vset.pattern.permute.xlu0 0
        %202 = vperm.xlu0 %201, %v192
        %v203 = vpop.permute.xlu0 %202
        %206 = vset.pattern.permute.xlu0 0
        %207 = vperm.xlu0 %206, %v193
        %v208 = vpop.permute.xlu0 %207
        %211 = vset.pattern.permute.xlu0 0
        %212 = vperm.xlu0 %211, %v194
        %v213 = vpop.permute.xlu0 %212
        %216 = vset.pattern.permute.xlu0 0
        %217 = vperm.xlu0 %216, %v195
        %v218 = vpop.permute.xlu0 %217
        %vm220 = vcmask 130048
        %v222 = vsel %vm220, %v196, 0
        %v225 = vsel %vm220, %v197, 0
        %227 = vmatpush.bf16.msra.mxu0 0
        %228 = vmatpush.bf16.msra.mxu0 0
        %229 = vmatpush.bf16.msra.mxu0 0
        %230 = vmatpush.bf16.msra.mxu0 0
        %231 = vmatpush.bf16.msra.mxu0 0
        %232 = vmatpush.bf16.msra.mxu0 0
        %233 = vmatpush.bf16.msra.mxu0 0
        %234 = vmatpush.bf16.msra.mxu0 %v198
        %235 = vmatmul.bf16.gmra.mxu0 %v222
        %v236 = vpop.f32.mrf.mxu0
        %v237 = vadd.f32 %v203, %v236
        %v238 = vpop.f32.mrf.mxu0
        %v239 = vadd.f32 %v208, %v238
        %240 = vmatmul.bf16.gmra.mxu0 %v225
        %v241 = vpop.f32.mrf.mxu0
        %v242 = vadd.f32 %v213, %v241
        %v243 = vpop.f32.mrf.mxu0
        %v244 = vadd.f32 %v218, %v243
        %245 = vdwg.mxu0
        %246 = vmatpush.bf16.msra.mxu0 0
        %247 = vmatpush.bf16.msra.mxu0 0
        %248 = vmatpush.bf16.msra.mxu0 0
        %249 = vmatpush.bf16.msra.mxu0 0
        %250 = vmatpush.bf16.msra.mxu0 0
        %251 = vmatpush.bf16.msra.mxu0 0
        %252 = vmatpush.bf16.msra.mxu0 0
        %253 = vmatpush.bf16.msra.mxu0 %v199
        %254 = vmatmul.bf16.gmra.mxu0 %v222
        %v255 = vpop.f32.mrf.mxu0
        %v256 = vadd.f32 %v203, %v255
        %v257 = vpop.f32.mrf.mxu0
        %v258 = vadd.f32 %v208, %v257
        %259 = vmatmul.bf16.gmra.mxu0 %v225
        %v260 = vpop.f32.mrf.mxu0
        %v261 = vadd.f32 %v213, %v260
        %v262 = vpop.f32.mrf.mxu0
        %v263 = vadd.f32 %v218, %v262
        %264 = vdwg.mxu0
        %v265 = vld [vmem:[#allocation5 + $0x40] sm:$0xff]
        %v266 = vld [vmem:[#allocation5 + $0x48] sm:$0xff]
        %v267 = vld [vmem:[#allocation5 + $0x50] sm:$0xff]
        %v268 = vld [vmem:[#allocation5 + $0x58] sm:$0xff]
        %v269 = vld [vmem:[#allocation5 + $0x60] sm:$0xff]
        %v270 = vld [vmem:[#allocation5 + $0x68] sm:$0xff]
        %v271 = vld [vmem:[#allocation5 + $0x70] sm:$0xff]
        %v272 = vld [vmem:[#allocation5 + $0x78] sm:$0xff]
        %v273 = vadd.f32 %v237, %v239
        %v274 = vadd.f32 %v273, %v242
        %v275 = vadd.f32 %v274, %v244
        %v276 = vrot.slane %v275, 4
        %v277 = vadd.f32 %v275, %v276
        %v278 = vrot.slane %v277, 2
        %v279 = vadd.f32 %v277, %v278
        %v280 = vrot.slane %v279, 1
        %v281 = vadd.f32 %v279, %v280
        %v282 = vadd.f32 %v256, %v258
        %v283 = vadd.f32 %v282, %v261
        %v284 = vadd.f32 %v283, %v263
        %v285 = vrot.slane %v284, 4
        %v286 = vadd.f32 %v284, %v285
        %v287 = vrot.slane %v286, 2
        %v288 = vadd.f32 %v286, %v287
        %v289 = vrot.slane %v288, 1
        %v290 = vadd.f32 %v288, %v289
        %v291 = vrcp.pop 32.0
        %v292 = vmul.f32 32.0, %v291
        %v293 = vsub.f32 1.0, %v292
        %v294 = vmul.f32 %v291, %v293
        %v295 = vadd.f32 %v291, %v294
        %vm296 = vweird.f32 %v291
        %v297 = vsel %vm296, %v291, %v295
        %v298 = vmul.f32 %v281, %v297
        %v299 = vmul.f32 %v290, %v297
        %v300 = vsub.f32 %v237, %v298
        %v301 = vsub.f32 %v256, %v299
        %v302 = vsub.f32 %v239, %v298
        %v303 = vsub.f32 %v258, %v299
        %v304 = vsub.f32 %v242, %v298
        %v305 = vsub.f32 %v261, %v299
        %v306 = vsub.f32 %v244, %v298
        %v307 = vsub.f32 %v263, %v299
        %v308 = vmul.f32 %v300, %v300
        %v309 = vmul.f32 %v301, %v301
        %v310 = vmul.f32 %v302, %v302
        %v311 = vmul.f32 %v303, %v303
        %v312 = vmul.f32 %v304, %v304
        %v313 = vmul.f32 %v305, %v305
        %v314 = vmul.f32 %v306, %v306
        %v315 = vmul.f32 %v307, %v307
        %v316 = vadd.f32 %v308, %v310
        %v317 = vadd.f32 %v316, %v312
        %v318 = vadd.f32 %v317, %v314
        %v319 = vrot.slane %v318, 4
        %v320 = vadd.f32 %v318, %v319
        %v321 = vrot.slane %v320, 2
        %v322 = vadd.f32 %v320, %v321
        %v323 = vrot.slane %v322, 1
        %v324 = vadd.f32 %v322, %v323
        %v325 = vadd.f32 %v309, %v311
        %v326 = vadd.f32 %v325, %v313
        %v327 = vadd.f32 %v326, %v315
        %v328 = vrot.slane %v327, 4
        %v329 = vadd.f32 %v327, %v328
        %v330 = vrot.slane %v329, 2
        %v331 = vadd.f32 %v329, %v330
        %v332 = vrot.slane %v331, 1
        %v333 = vadd.f32 %v331, %v332
        %v334 = vmul.f32 %v324, %v297
        %v335 = vmul.f32 %v333, %v297
        %v336 = vadd.f32 %v334, 1e-05
        %v337 = vadd.f32 %v335, 1e-05
        %v338 = vrsqrt.pop %v336
        %v339 = vmul.f32 %v338, %v336
        %v340 = vmul.f32 %v339, %v338
        %v341 = vmul.f32 0.5, %v340
        %v342 = vsub.f32 1.5, %v341
        %v343 = vmul.f32 %v338, %v342
        %vm344 = vweird.f32 %v336
        %vm345 = vweird.f32 %v338
        %vm346 = vmor %vm344, %vm345
        %v347 = vsel %vm346, %v338, %v343
        %v348 = vrsqrt.pop %v337
        %v349 = vmul.f32 %v348, %v337
        %v350 = vmul.f32 %v349, %v348
        %v351 = vmul.f32 0.5, %v350
        %v352 = vsub.f32 1.5, %v351
        %v353 = vmul.f32 %v348, %v352
        %vm354 = vweird.f32 %v337
        %vm355 = vweird.f32 %v348
        %vm356 = vmor %vm354, %vm355
        %v357 = vsel %vm356, %v348, %v353
        %v358 = vmul.f32 %v300, %v347
        %v359 = vmul.f32 %v301, %v357
        %v360 = vmul.f32 %v302, %v347
        %v361 = vmul.f32 %v303, %v357
        %v362 = vmul.f32 %v304, %v347
        %v363 = vmul.f32 %v305, %v357
        %v364 = vmul.f32 %v306, %v347
        %v365 = vmul.f32 %v307, %v357
        %367 = vset.pattern.permute.xlu0 0
        %368 = vperm.xlu0 %367, %v265
        %v369 = vpop.permute.xlu0 %368
        %372 = vset.pattern.permute.xlu0 0
        %373 = vperm.xlu0 %372, %v266
        %v374 = vpop.permute.xlu0 %373
        %377 = vset.pattern.permute.xlu0 0
        %378 = vperm.xlu0 %377, %v267
        %v379 = vpop.permute.xlu0 %378
        %382 = vset.pattern.permute.xlu0 0
        %383 = vperm.xlu0 %382, %v268
        %v384 = vpop.permute.xlu0 %383
        %v386 = vmul.f32 %v358, %v369
        %v387 = vmul.f32 %v359, %v369
        %v388 = vmul.f32 %v360, %v374
        %v389 = vmul.f32 %v361, %v374
        %v390 = vmul.f32 %v362, %v379
        %v391 = vmul.f32 %v363, %v379
        %v392 = vmul.f32 %v364, %v384
        %v393 = vmul.f32 %v365, %v384
        %395 = vset.pattern.permute.xlu0 0
        %396 = vperm.xlu0 %395, %v269
        %v397 = vpop.permute.xlu0 %396
        %400 = vset.pattern.permute.xlu0 0
        %401 = vperm.xlu0 %400, %v270
        %v402 = vpop.permute.xlu0 %401
        %405 = vset.pattern.permute.xlu0 0
        %406 = vperm.xlu0 %405, %v271
        %v407 = vpop.permute.xlu0 %406
        %410 = vset.pattern.permute.xlu0 0
        %411 = vperm.xlu0 %410, %v272
        %v412 = vpop.permute.xlu0 %411
        %v414 = vadd.f32 %v386, %v397
        %v415 = vadd.f32 %v387, %v397
        %v416 = vadd.f32 %v388, %v402
        %v417 = vadd.f32 %v389, %v402
        %v418 = vadd.f32 %v390, %v407
        %v419 = vadd.f32 %v391, %v407
        %v420 = vadd.f32 %v392, %v412
        %v421 = vadd.f32 %v393, %v412
        %v422 = vmul.f32 %v414, 0.01
        %v423 = vmul.f32 %v415, 0.01
        %v424 = vmul.f32 %v416, 0.01
        %v425 = vmul.f32 %v417, 0.01
        %v426 = vmul.f32 %v418, 0.01
        %v427 = vmul.f32 %v419, 0.01
        %v428 = vmul.f32 %v420, 0.01
        %v429 = vmul.f32 %v421, 0.01
        %v430 = vmax.f32 %v414, %v422
        %v431 = vmax.f32 %v415, %v423
        %v432 = vmax.f32 %v416, %v424
        %v433 = vmax.f32 %v417, %v425
        %v434 = vmax.f32 %v418, %v426
        %v435 = vmax.f32 %v419, %v427
        %v436 = vmax.f32 %v420, %v428
        %v437 = vmax.f32 %v421, %v429
        %v438 = vld [vmem:[#allocation5 + $0x80] sm:$0xff]
        %v439 = vld [vmem:[#allocation5 + $0x88] sm:$0xff]
        %v440 = vld [vmem:[#allocation5 + $0x90] sm:$0xff]
        %v441 = vld [vmem:[#allocation5 + $0x98] sm:$0xff]
        %v442 = vld [vmem:[#allocation5 + $0xa0] sm:$0xff]
        %v443 = vld [vmem:[#allocation5 + $0xa8] sm:$0xff]
        %v444 = vld [vmem:[#allocation5 + $0xb0] sm:$0xff]
        %v445 = vld [vmem:[#allocation5 + $0xb8] sm:$0xff]
        %v446 = vpack.c.bf16 %v439, %v438
        %v447 = vpack.c.bf16 %v441, %v440
        %v448 = vpack.c.bf16 %v432, %v430
        %v449 = vpack.c.bf16 %v433, %v431
        %v450 = vpack.c.bf16 %v436, %v434
        %v451 = vpack.c.bf16 %v437, %v435
        %453 = vset.pattern.permute.xlu0 0
        %454 = vperm.xlu0 %453, %v442
        %v455 = vpop.permute.xlu0 %454
        %458 = vset.pattern.permute.xlu0 0
        %459 = vperm.xlu0 %458, %v443
        %v460 = vpop.permute.xlu0 %459
        %463 = vset.pattern.permute.xlu0 0
        %464 = vperm.xlu0 %463, %v444
        %v465 = vpop.permute.xlu0 %464
        %468 = vset.pattern.permute.xlu0 0
        %469 = vperm.xlu0 %468, %v445
        %v470 = vpop.permute.xlu0 %469
        %vm472 = vcmask 261120
        %v474 = vsel %vm472, %v446, 0
        %v477 = vsel %vm472, %v447, 0
        %479 = vmatpush.bf16.msra.mxu0 0
        %480 = vmatpush.bf16.msra.mxu0 0
        %481 = vmatpush.bf16.msra.mxu0 0
        %482 = vmatpush.bf16.msra.mxu0 0
        %483 = vmatpush.bf16.msra.mxu0 0
        %484 = vmatpush.bf16.msra.mxu0 0
        %485 = vmatpush.bf16.msra.mxu0 %v450
        %486 = vmatpush.bf16.msra.mxu0 %v448
        %487 = vmatmul.bf16.gmra.mxu0 %v474
        %v488 = vpop.f32.mrf.mxu0
        %v489 = vadd.f32 %v455, %v488
        %v490 = vpop.f32.mrf.mxu0
        %v491 = vadd.f32 %v460, %v490
        %492 = vmatmul.bf16.gmra.mxu0 %v477
        %v493 = vpop.f32.mrf.mxu0
        %v494 = vadd.f32 %v465, %v493
        %v495 = vpop.f32.mrf.mxu0
        %v496 = vadd.f32 %v470, %v495
        %497 = vdwg.mxu0
        %498 = vmatpush.bf16.msra.mxu0 0
        %499 = vmatpush.bf16.msra.mxu0 0
        %500 = vmatpush.bf16.msra.mxu0 0
        %501 = vmatpush.bf16.msra.mxu0 0
        %502 = vmatpush.bf16.msra.mxu0 0
        %503 = vmatpush.bf16.msra.mxu0 0
        %504 = vmatpush.bf16.msra.mxu0 %v451
        %505 = vmatpush.bf16.msra.mxu0 %v449
        %506 = vmatmul.bf16.gmra.mxu0 %v474
        %v507 = vpop.f32.mrf.mxu0
        %v508 = vadd.f32 %v455, %v507
        %v509 = vpop.f32.mrf.mxu0
        %v510 = vadd.f32 %v460, %v509
        %511 = vmatmul.bf16.gmra.mxu0 %v477
        %v512 = vpop.f32.mrf.mxu0
        %v513 = vadd.f32 %v465, %v512
        %v514 = vpop.f32.mrf.mxu0
        %v515 = vadd.f32 %v470, %v514
        %516 = vdwg.mxu0
        %v517 = vld [vmem:[#allocation5 + $0xc0] sm:$0xff]
        %v518 = vld [vmem:[#allocation5 + $0xc8] sm:$0xff]
        %v519 = vld [vmem:[#allocation5 + $0xd0] sm:$0xff]
        %v520 = vld [vmem:[#allocation5 + $0xd8] sm:$0xff]
        %v521 = vld [vmem:[#allocation5 + $0xe0] sm:$0xff]
        %v522 = vld [vmem:[#allocation5 + $0xe8] sm:$0xff]
        %v523 = vld [vmem:[#allocation5 + $0xf0] sm:$0xff]
        %v524 = vld [vmem:[#allocation5 + $0xf8] sm:$0xff]
        %v525 = vadd.f32 %v489, %v491
        %v526 = vadd.f32 %v525, %v494
        %v527 = vadd.f32 %v526, %v496
        %v528 = vrot.slane %v527, 4
        %v529 = vadd.f32 %v527, %v528
        %v530 = vrot.slane %v529, 2
        %v531 = vadd.f32 %v529, %v530
        %v532 = vrot.slane %v531, 1
        %v533 = vadd.f32 %v531, %v532
        %v534 = vadd.f32 %v508, %v510
        %v535 = vadd.f32 %v534, %v513
        %v536 = vadd.f32 %v535, %v515
        %v537 = vrot.slane %v536, 4
        %v538 = vadd.f32 %v536, %v537
        %v539 = vrot.slane %v538, 2
        %v540 = vadd.f32 %v538, %v539
        %v541 = vrot.slane %v540, 1
        %v542 = vadd.f32 %v540, %v541
        %v543 = vmul.f32 %v533, %v297
        %v544 = vmul.f32 %v542, %v297
        %v545 = vsub.f32 %v489, %v543
        %v546 = vsub.f32 %v508, %v544
        %v547 = vsub.f32 %v491, %v543
        %v548 = vsub.f32 %v510, %v544
        %v549 = vsub.f32 %v494, %v543
        %v550 = vsub.f32 %v513, %v544
        %v551 = vsub.f32 %v496, %v543
        %v552 = vsub.f32 %v515, %v544
        %v553 = vmul.f32 %v545, %v545
        %v554 = vmul.f32 %v546, %v546
        %v555 = vmul.f32 %v547, %v547
        %v556 = vmul.f32 %v548, %v548
        %v557 = vmul.f32 %v549, %v549
        %v558 = vmul.f32 %v550, %v550
        %v559 = vmul.f32 %v551, %v551
        %v560 = vmul.f32 %v552, %v552
        %v561 = vadd.f32 %v553, %v555
        %v562 = vadd.f32 %v561, %v557
        %v563 = vadd.f32 %v562, %v559
        %v564 = vrot.slane %v563, 4
        %v565 = vadd.f32 %v563, %v564
        %v566 = vrot.slane %v565, 2
        %v567 = vadd.f32 %v565, %v566
        %v568 = vrot.slane %v567, 1
        %v569 = vadd.f32 %v567, %v568
        %v570 = vadd.f32 %v554, %v556
        %v571 = vadd.f32 %v570, %v558
        %v572 = vadd.f32 %v571, %v560
        %v573 = vrot.slane %v572, 4
        %v574 = vadd.f32 %v572, %v573
        %v575 = vrot.slane %v574, 2
        %v576 = vadd.f32 %v574, %v575
        %v577 = vrot.slane %v576, 1
        %v578 = vadd.f32 %v576, %v577
        %v579 = vmul.f32 %v569, %v297
        %v580 = vmul.f32 %v578, %v297
        %v581 = vadd.f32 %v579, 1e-05
        %v582 = vadd.f32 %v580, 1e-05
        %v583 = vrsqrt.pop %v581
        %v584 = vmul.f32 %v583, %v581
        %v585 = vmul.f32 %v584, %v583
        %v586 = vmul.f32 0.5, %v585
        %v587 = vsub.f32 1.5, %v586
        %v588 = vmul.f32 %v583, %v587
        %vm589 = vweird.f32 %v581
        %vm590 = vweird.f32 %v583
        %vm591 = vmor %vm589, %vm590
        %v592 = vsel %vm591, %v583, %v588
        %v593 = vrsqrt.pop %v582
        %v594 = vmul.f32 %v593, %v582
        %v595 = vmul.f32 %v594, %v593
        %v596 = vmul.f32 0.5, %v595
        %v597 = vsub.f32 1.5, %v596
        %v598 = vmul.f32 %v593, %v597
        %vm599 = vweird.f32 %v582
        %vm600 = vweird.f32 %v593
        %vm601 = vmor %vm599, %vm600
        %v602 = vsel %vm601, %v593, %v598
        %v603 = vmul.f32 %v545, %v592
        %v604 = vmul.f32 %v546, %v602
        %v605 = vmul.f32 %v547, %v592
        %v606 = vmul.f32 %v548, %v602
        %v607 = vmul.f32 %v549, %v592
        %v608 = vmul.f32 %v550, %v602
        %v609 = vmul.f32 %v551, %v592
        %v610 = vmul.f32 %v552, %v602
        %612 = vset.pattern.permute.xlu0 0
        %613 = vperm.xlu0 %612, %v517
        %v614 = vpop.permute.xlu0 %613
        %617 = vset.pattern.permute.xlu0 0
        %618 = vperm.xlu0 %617, %v518
        %v619 = vpop.permute.xlu0 %618
        %622 = vset.pattern.permute.xlu0 0
        %623 = vperm.xlu0 %622, %v519
        %v624 = vpop.permute.xlu0 %623
        %627 = vset.pattern.permute.xlu0 0
        %628 = vperm.xlu0 %627, %v520
        %v629 = vpop.permute.xlu0 %628
        %v631 = vmul.f32 %v603, %v614
        %v632 = vmul.f32 %v604, %v614
        %v633 = vmul.f32 %v605, %v619
        %v634 = vmul.f32 %v606, %v619
        %v635 = vmul.f32 %v607, %v624
        %v636 = vmul.f32 %v608, %v624
        %v637 = vmul.f32 %v609, %v629
        %v638 = vmul.f32 %v610, %v629
        %640 = vset.pattern.permute.xlu0 0
        %641 = vperm.xlu0 %640, %v521
        %v642 = vpop.permute.xlu0 %641
        %645 = vset.pattern.permute.xlu0 0
        %646 = vperm.xlu0 %645, %v522
        %v647 = vpop.permute.xlu0 %646
        %650 = vset.pattern.permute.xlu0 0
        %651 = vperm.xlu0 %650, %v523
        %v652 = vpop.permute.xlu0 %651
        %655 = vset.pattern.permute.xlu0 0
        %656 = vperm.xlu0 %655, %v524
        %v657 = vpop.permute.xlu0 %656
        %v659 = vadd.f32 %v631, %v642
        %v660 = vadd.f32 %v632, %v642
        %v661 = vadd.f32 %v633, %v647
        %v662 = vadd.f32 %v634, %v647
        %v663 = vadd.f32 %v635, %v652
        %v664 = vadd.f32 %v636, %v652
        %v665 = vadd.f32 %v637, %v657
        %v666 = vadd.f32 %v638, %v657
        %v667 = vmul.f32 %v659, 0.01
        %v668 = vmul.f32 %v660, 0.01
        %v669 = vmul.f32 %v661, 0.01
        %v670 = vmul.f32 %v662, 0.01
        %v671 = vmul.f32 %v663, 0.01
        %v672 = vmul.f32 %v664, 0.01
        %v673 = vmul.f32 %v665, 0.01
        %v674 = vmul.f32 %v666, 0.01
        %v675 = vmax.f32 %v659, %v667
        %v676 = vmax.f32 %v660, %v668
        %v677 = vmax.f32 %v661, %v669
        %v678 = vmax.f32 %v662, %v670
        %v679 = vmax.f32 %v663, %v671
        %v680 = vmax.f32 %v664, %v672
        %v681 = vmax.f32 %v665, %v673
        %v682 = vmax.f32 %v666, %v674
        %v683 = vld [vmem:[#allocation5 + $0x100] sm:$0xff]
        %v684 = vld [vmem:[#allocation5 + $0x108] sm:$0xff]
        %v685 = vpack.c.bf16 %v683, %v683
        %v686 = vpack.c.bf16 %v677, %v675
        %v687 = vpack.c.bf16 %v678, %v676
        %v688 = vpack.c.bf16 %v681, %v679
        %v689 = vpack.c.bf16 %v682, %v680
        %691 = vset.pattern.permute.xlu0 0
        %692 = vperm.xlu0 %691, %v684
        %v693 = vpop.permute.xlu0 %692
        %v696 = vsel %vm472, %v685, 0
        %698 = vmatpush.bf16.msra.mxu0 0
        %699 = vmatpush.bf16.msra.mxu0 0
        %700 = vmatpush.bf16.msra.mxu0 0
        %701 = vmatpush.bf16.msra.mxu0 0
        %702 = vmatpush.bf16.msra.mxu0 0
        %703 = vmatpush.bf16.msra.mxu0 0
        %704 = vmatpush.bf16.msra.mxu0 %v688
        %705 = vmatpush.bf16.msra.mxu0 %v686
        %706 = vmatmul.bf16.gmra.mxu0 %v696
        %v707 = vpop.f32.mrf.mxu0
        %v708 = vadd.f32 %v693, %v707
        %v709 = vpop.f32.mrf.mxu0
        %710 = vdwg.mxu0
        %711 = vmatpush.bf16.msra.mxu0 0
        %712 = vmatpush.bf16.msra.mxu0 0
        %713 = vmatpush.bf16.msra.mxu0 0
        %714 = vmatpush.bf16.msra.mxu0 0
        %715 = vmatpush.bf16.msra.mxu0 0
        %716 = vmatpush.bf16.msra.mxu0 0
        %717 = vmatpush.bf16.msra.mxu0 %v689
        %718 = vmatpush.bf16.msra.mxu0 %v687
        %719 = vmatmul.bf16.gmra.mxu0 %v696
        %v720 = vpop.f32.mrf.mxu0
        %v721 = vadd.f32 %v693, %v720
        %v722 = vpop.f32.mrf.mxu0
        %723 = vdwg.mxu0
        %724 = vst [vmem:[%s180] sm:$0xff] %v708
        %725 = vst [vmem:[%s180 + $0x8] sm:$0xff] %v721
        %s726 = sand.u32 %s75, 1
        %s727 = scalar_lea.sflag [#allocation4], %s726
        %s728 = sand.u32 %s75, 1
        %s729 = smul.addr %s728, 16
        %s730 = scalar_lea.vmem [#allocation7], %s729
        // Predicated region
        $region37: #{tpu_custom_call.1} parent=27 // pred_check
          %p731 = pneg %p85
        $region38: #{tpu_custom_call.1} parent=27 // pred_check_branch
          %733 = sbr.rel (%p731) target = $region40
        $region39: #{tpu_custom_call.1} parent=27 // pred_region
          %s734 = smul.u32 2, %s20
          %736 = vsyncadd %s727, 0
          %s737 = smul.addr %s734, 8
          %s738 = scalar_lea.hbm %s2, %s737
          %s740 = sshll.u32 %s730, 4
          %s741 = int_to_ptr.vmem [resolvable:$true] %s740
          %s742 = sshll.u32 %s738, 4
          %s743 = int_to_ptr.hbm [resolvable:$true] %s742
          %745 = dma.vmem_to_hbm [thread:$0]  %s741, 256, %s743, %s727
        $region40: #{tpu_custom_call.1} parent=27 // pred_fallthru
          _
      $region28: #{tpu_custom_call.1} parent=5 // pred_fallthru
        _
      %p746 = scmp.le.s32.totalorder 2, %s15
      // Predicated region
      $region41: #{tpu_custom_call.1} parent=5 // pred_check
        %p747 = pneg %p746
      $region42: #{tpu_custom_call.1} parent=5 // pred_check_branch
        %749 = sbr.rel (%p747) target = $region44
      $region43: #{tpu_custom_call.1} parent=5 // pred_region
        %s750 = ssub.s32 %s15, 2
        // Predicated region
        $region45: #{tpu_custom_call.1} parent=43 // pred_check
          %p751 = pneg %p91
        $region46: #{tpu_custom_call.1} parent=43 // pred_check_branch
          %753 = sbr.rel (%p751) target = $region48
        $region47: #{tpu_custom_call.1} parent=43 // pred_region
          %s754 = sand.u32 %s76, 1
          %s755 = scalar_lea.sflag [#allocation4], %s754
          %s756 = sand.u32 %s76, 1
          %s757 = smul.addr %s756, 16
          %s758 = scalar_lea.vmem [#allocation7], %s757
          %760 = dma.done %s755, 256
        $region48: #{tpu_custom_call.1} parent=43 // pred_fallthru
          _
      $region44: #{tpu_custom_call.1} parent=5 // pred_fallthru
        _
    $region6: #{tpu_custom_call.1} parent=1 // loop_footer
      %s19 = sadd.s32 1, %s15
    $region7: #{tpu_custom_call.1} parent=1 // loop_footer_branch
      %14 = sbr.rel target = $region3
    $region8: #{tpu_custom_call.1} parent=1 // loop_exit
      _
    %761 = vsyncpa [#allocation3], 1
    %s762 = scalar_lea.sflag [#allocation3], 1
    %763 = vsyncpa %s762, 1
    %764 = vsyncpa [#allocation6], 1
    %765 = vsyncpa [#allocation4], 1
    %s766 = scalar_lea.sflag [#allocation4], 1
    %767 = vsyncpa %s766, 1

</llo_original>
